<compile_context>
chip_gen: v7x
topology: tpu7x:2x2x1
jax: 0.10.0
libtpu: 0.0.40
codegen_flags: <defaults>
</compile_context>

<pallas_src>
import jax
import jax.numpy as jnp
from jax import lax
from jax.experimental import pallas as pl
from jax.experimental.pallas import tpu as pltpu

# ---------------- configuration (small, consistent with the module) ----------
B = 2          # batch
C_IN = 8       # n_inputs
C_OUT = 16     # n_outputs  (C_IN != C_OUT -> downsample 1x1 conv exists)
T = 32         # sequence length
K = 3          # kernel_size
STRIDE = 1
DILATION = 2
PAD = (K - 1) * DILATION        # causal padding; Chomp1d removes trailing PAD

P_ROWS = 3 * C_OUT              # packed parameter slab rows  (48)
P_COLS = K * C_OUT + 1          # packed parameter slab cols  (49)


# ----------------------------- Pallas kernel ---------------------------------
def temporal_block_kernel(x_ref, p_ref, o_ref):
    """Whole problem in one grid step; both batches share each MXU call.

    x_ref : (C_IN, B*T)   input, batches contiguous along the lane (time) axis
    p_ref : (P_ROWS, P_COLS) packed parameters:
              rows [0:2*C_OUT), cols [0:K*C_IN+1)  = [w1 | b1 ; wd(tap0) | bd]
              rows [2*C_OUT:3*C_OUT), cols [0:K*C_OUT+1) = [w2 | b2]
    o_ref : (C_OUT, B*T)  lane-dense output
    """
    # ---- hoisted constants: iota / causal masks / ones-row computed ONCE ----
    t_mod = lax.broadcasted_iota(jnp.int32, (1, B * T), 1) % T
    shifts = sorted({(K - 1 - k) * DILATION for k in range(K)} - {0})
    causal_masks = {s: (t_mod >= s) for s in shifts}
    ones_row = jnp.ones((1, B * T), jnp.float32)

    def shift_time(a, s):
        # a: (C, B*T), batches are contiguous T-blocks along lanes.
        # y[:, b*T + t] = a[:, b*T + t - s] for t >= s, else 0 (per-batch
        # causal delay == left-pad-by-PAD + Chomp1d). Roll is XLU (cheap);
        # the mask kills both the intra-batch head and any cross-batch leak.
        if s == 0:
            return a
        rolled = pltpu.roll(a, shift=s, axis=1)
        return jnp.where(causal_masks[s], rolled, 0.0)

    def im2col(a):
        # (C, B*T) -> (K*C + 1, B*T); row-block k holds the input delayed by
        # (K-1-k)*DILATION; final ones-row folds the bias into the matmul.
        return jnp.concatenate(
            [shift_time(a, (K - 1 - k) * DILATION) for k in range(K)]
            + [ones_row],
            axis=0)

    params = p_ref[...]                               # one (48, 49) load
    w1a = params[:2 * C_OUT, :K * C_IN + 1]           # (2*C_OUT, 25)
    w2a = params[2 * C_OUT:, :]                       # (C_OUT, 49)

    x = x_ref[...]                                    # (C_IN, B*T)

    # ---- conv1 (+bias) AND 1x1 downsample (+bias): ONE fused MXU matmul ----
    h1r = jnp.dot(w1a, im2col(x), preferred_element_type=jnp.float32)  # (2*C_OUT, B*T)
    h1 = jnp.maximum(h1r[:C_OUT], 0.0)                # ReLU; dropout = identity
    res = h1r[C_OUT:]                                 # residual branch (free)

    # ---- conv2 (+bias) + chomp + ReLU: ONE MXU matmul ----
    h2 = jnp.maximum(
        jnp.dot(w2a, im2col(h1), preferred_element_type=jnp.float32), 0.0)

    # ---- final ReLU(out + res): single lane-dense store ----
    o_ref[...] = jnp.maximum(h2 + res, 0.0)


# ------------------------------ wrapper ---------------------------------------
@jax.jit
def temporal_block(x, params):
    """x: (B, C_IN, T) PyTorch NCW. Returns (B, C_OUT, T) NCW.

    Wrapper does only layout plumbing (lane-dense (C, B*T) slabs in/out).
    """
    x_flat = jnp.transpose(x, (1, 0, 2)).reshape(C_IN, B * T)
    out_flat = pl.pallas_call(
        temporal_block_kernel,
        out_shape=jax.ShapeDtypeStruct((C_OUT, B * T), jnp.float32),
        grid_spec=pltpu.PrefetchScalarGridSpec(
            num_scalar_prefetch=0,
            grid=(1,),                                 # single step
            in_specs=[
                pl.BlockSpec((C_IN, B * T), lambda i: (0, 0)),
                pl.BlockSpec((P_ROWS, P_COLS), lambda i: (0, 0)),
            ],
            out_specs=pl.BlockSpec((C_OUT, B * T), lambda i: (0, 0)),
        ),
        compiler_params=pltpu.CompilerParams(
            dimension_semantics=("arbitrary",)),
    )(x_flat, params)
    return jnp.transpose(out_flat.reshape(C_OUT, B, T), (1, 0, 2))


# -------------------------- pure-JAX reference --------------------------------
def _conv1d_ref(x, w_oik, b, dilation, padding):
    y = lax.conv_general_dilated(
        x, w_oik, window_strides=(STRIDE,), padding=[(padding, padding)],
        rhs_dilation=(dilation,), dimension_numbers=('NCH', 'OIH', 'NCH'))
    return y + b[None, :, None]


def temporal_block_ref(x, w1_oik, b1, w2_oik, b2, wd_oik, bd):
    h = _conv1d_ref(x, w1_oik, b1, DILATION, PAD)
    h = h[:, :, :-PAD]                                   # Chomp1d
    h = jnp.maximum(h, 0.0)                              # ReLU (dropout = id)
    h = _conv1d_ref(h, w2_oik, b2, DILATION, PAD)
    h = h[:, :, :-PAD]
    h = jnp.maximum(h, 0.0)
    res = _conv1d_ref(x, wd_oik, bd, 1, 0)               # downsample 1x1
    return jnp.maximum(h + res, 0.0)


# ------------------------- host-side parameter packing ------------------------
def pack_params(w1_oik, b1, w2_oik, b2, wd_oik, bd):
    # taps stacked along contraction: w_k[o, k*C + i] = w_oik[o, i, k]
    w1_k = jnp.transpose(w1_oik, (0, 2, 1)).reshape(C_OUT, K * C_IN)    # (16,24)
    w2_k = jnp.transpose(w2_oik, (0, 2, 1)).reshape(C_OUT, K * C_OUT)   # (16,48)
    wd_k = wd_oik[:, :, 0]                                              # (16, 8)

    # W1A: rows 0..C_OUT-1 = [w1 | b1]; rows C_OUT..2*C_OUT-1 put wd in the
    # shift-0 tap block (last C_IN weight columns) and bd in the bias column.
    w1a = jnp.zeros((2 * C_OUT, K * C_IN + 1), jnp.float32)
    w1a = w1a.at[:C_OUT, :K * C_IN].set(w1_k)
    w1a = w1a.at[:C_OUT, K * C_IN].set(b1)
    w1a = w1a.at[C_OUT:, (K - 1) * C_IN:K * C_IN].set(wd_k)
    w1a = w1a.at[C_OUT:, K * C_IN].set(bd)

    w2a = jnp.concatenate([w2_k, b2[:, None]], axis=1)                  # (16,49)

    params = jnp.zeros((P_ROWS, P_COLS), jnp.float32)
    params = params.at[:2 * C_OUT, :K * C_IN + 1].set(w1a)
    params = params.at[2 * C_OUT:, :].set(w2a)
    return params


# --------------------------------- main ----------------------------------------
if __name__ == "__main__":
    key = jax.random.PRNGKey(0)
    kx, k1, k2, k3, k4, k5, k6 = jax.random.split(key, 7)

    # deterministic synthetic parameters (PyTorch Conv1d weight layout: (O, I, K))
    w1_oik = 0.01 * jax.random.normal(k1, (C_OUT, C_IN, K), jnp.float32)
    w2_oik = 0.01 * jax.random.normal(k2, (C_OUT, C_OUT, K), jnp.float32)
    wd_oik = 0.01 * jax.random.normal(k3, (C_OUT, C_IN, 1), jnp.float32)
    b1 = 0.05 * jax.random.normal(k4, (C_OUT,), jnp.float32)
    b2 = 0.05 * jax.random.normal(k5, (C_OUT,), jnp.float32)
    bd = 0.05 * jax.random.normal(k6, (C_OUT,), jnp.float32)

    params = pack_params(w1_oik, b1, w2_oik, b2, wd_oik, bd)   # one DMA slab

    # input in PyTorch NCW layout
    x = jax.random.normal(kx, (B, C_IN, T), jnp.float32)

    out = temporal_block(x, params)
    out = jax.block_until_ready(out)

    ref = temporal_block_ref(x, w1_oik, b1, w2_oik, b2, wd_oik, bd)
    ref = jax.block_until_ready(ref)

    assert out.shape == (B, C_OUT, T), out.shape
    assert jnp.allclose(out, ref, atol=1e-4, rtol=1e-4), float(
        jnp.max(jnp.abs(out - ref)))

    print("KERNEL_OK")
</pallas_src>

<mosaic_0001>
module attributes {stable_mosaic.version = 11 : i64} {
  func.func @temporal_block_kernel(%arg0: i32, %arg1: memref<8x64xf32, #tpu.memory_space<vmem>>, %arg2: memref<48x49xf32, #tpu.memory_space<vmem>>, %arg3: memref<16x64xf32, #tpu.memory_space<vmem>>) attributes {dimension_semantics = [#tpu.dimension_semantics<arbitrary>], iteration_bounds = array<i64: 1>, scalar_prefetch = 0 : i64, scratch_operands = 0 : i64, tpu.core_type = #tpu.core_type<tc>, window_params = [{pipeline_mode = #tpu.pipeline_mode<synchronous>, transform_indices = @transform_0, window_bounds = array<i64: 8, 64>}, {pipeline_mode = #tpu.pipeline_mode<synchronous>, transform_indices = @transform_1, window_bounds = array<i64: 48, 49>}, {pipeline_mode = #tpu.pipeline_mode<synchronous>, transform_indices = @transform_2, window_bounds = array<i64: 16, 64>}]} {
    %0 = tpu.iota {dimensions = array<i32: 1>} : vector<1x64xi32>
    %c32_i32 = arith.constant 32 : i32
    %c0_i32 = arith.constant 0 : i32
    %1 = arith.cmpi eq, %c32_i32, %c0_i32 : i32
    %c1_i32 = arith.constant 1 : i32
    %2 = arith.select %1, %c1_i32, %c32_i32 : i32
    %3 = vector.broadcast %2 : i32 to vector<1x64xi32>
    %4 = arith.remsi %0, %3 : vector<1x64xi32>
    %c0_i32_0 = arith.constant 0 : i32
    %5 = vector.broadcast %c0_i32_0 : i32 to vector<1x64xi32>
    %6 = arith.cmpi ne, %4, %5 : vector<1x64xi32>
    %c0_i32_1 = arith.constant 0 : i32
    %7 = vector.broadcast %c0_i32_1 : i32 to vector<1x64xi32>
    %8 = arith.cmpi slt, %4, %7 : vector<1x64xi32>
    %c0_i32_2 = arith.constant 0 : i32
    %9 = arith.cmpi slt, %2, %c0_i32_2 : i32
    %10 = vector.broadcast %9 : i1 to vector<1x64xi1>
    %11 = vector.broadcast %10 : vector<1x64xi1> to vector<1x64xi1>
    %12 = arith.xori %8, %11 : vector<1x64xi1>
    %13 = arith.andi %12, %6 : vector<1x64xi1>
    %14 = vector.broadcast %2 : i32 to vector<1x64xi32>
    %15 = arith.addi %4, %14 : vector<1x64xi32>
    %16 = arith.select %13, %15, %4 : vector<1x64xi1>, vector<1x64xi32>
    %c2_i32 = arith.constant 2 : i32
    %17 = vector.broadcast %c2_i32 : i32 to vector<1x64xi32>
    %18 = arith.cmpi sge, %16, %17 : vector<1x64xi32>
    %c4_i32 = arith.constant 4 : i32
    %19 = vector.broadcast %c4_i32 : i32 to vector<1x64xi32>
    %20 = arith.cmpi sge, %16, %19 : vector<1x64xi32>
    %cst = arith.constant 1.000000e+00 : f32
    %21 = vector.broadcast %cst : f32 to vector<1x64xf32>
    %c0 = arith.constant 0 : index
    %c0_3 = arith.constant 0 : index
    %22 = vector.load %arg2[%c0, %c0_3] : memref<48x49xf32, #tpu.memory_space<vmem>>, vector<48x49xf32>
    %23 = vector.extract_strided_slice %22 {offsets = [0, 0], sizes = [32, 25], strides = [1, 1]} : vector<48x49xf32> to vector<32x25xf32>
    %24 = vector.extract_strided_slice %22 {offsets = [32, 0], sizes = [16, 49], strides = [1, 1]} : vector<48x49xf32> to vector<16x49xf32>
    %c0_4 = arith.constant 0 : index
    %c0_5 = arith.constant 0 : index
    %25 = vector.load %arg1[%c0_4, %c0_5] : memref<8x64xf32, #tpu.memory_space<vmem>>, vector<8x64xf32>
    %c4_i32_6 = arith.constant 4 : i32
    %26 = tpu.dynamic_rotate %25 by %c4_i32_6 dim 1 : vector<8x64xf32>, i32 -> vector<8x64xf32>
    %cst_7 = arith.constant 0.000000e+00 : f32
    %27 = vector.shape_cast %20 : vector<1x64xi1> to vector<1x64xi1>
    %28 = vector.broadcast %27 : vector<1x64xi1> to vector<8x64xi1>
    %29 = vector.broadcast %cst_7 : f32 to vector<8x64xf32>
    %30 = arith.select %28, %26, %29 : vector<8x64xi1>, vector<8x64xf32>
    %c2_i32_8 = arith.constant 2 : i32
    %31 = tpu.dynamic_rotate %25 by %c2_i32_8 dim 1 : vector<8x64xf32>, i32 -> vector<8x64xf32>
    %cst_9 = arith.constant 0.000000e+00 : f32
    %32 = vector.shape_cast %18 : vector<1x64xi1> to vector<1x64xi1>
    %33 = vector.broadcast %32 : vector<1x64xi1> to vector<8x64xi1>
    %34 = vector.broadcast %cst_9 : f32 to vector<8x64xf32>
    %35 = arith.select %33, %31, %34 : vector<8x64xi1>, vector<8x64xf32>
    %36 = tpu.concatenate %30, %35, %25, %21 in 0 : vector<8x64xf32>, vector<8x64xf32>, vector<8x64xf32>, vector<1x64xf32> -> vector<25x64xf32>
    %cst_10 = arith.constant dense<0.000000e+00> : vector<32x64xf32>
    %37 = tpu.matmul %23, %36, %cst_10 {dimension_numbers = #tpu.dot_dimension_numbers<[1], [0], [0], [1], [0, 0, 1, 1], [], []>} : vector<32x25xf32>, vector<25x64xf32>, vector<32x64xf32> -> vector<32x64xf32>
    %38 = vector.extract_strided_slice %37 {offsets = [0, 0], sizes = [16, 64], strides = [1, 1]} : vector<32x64xf32> to vector<16x64xf32>
    %cst_11 = arith.constant 0.000000e+00 : f32
    %39 = vector.broadcast %cst_11 : f32 to vector<16x64xf32>
    %40 = arith.maximumf %38, %39 : vector<16x64xf32>
    %41 = vector.extract_strided_slice %37 {offsets = [16, 0], sizes = [16, 64], strides = [1, 1]} : vector<32x64xf32> to vector<16x64xf32>
    %c4_i32_12 = arith.constant 4 : i32
    %42 = tpu.dynamic_rotate %40 by %c4_i32_12 dim 1 : vector<16x64xf32>, i32 -> vector<16x64xf32>
    %cst_13 = arith.constant 0.000000e+00 : f32
    %43 = vector.shape_cast %20 : vector<1x64xi1> to vector<1x64xi1>
    %44 = vector.broadcast %43 : vector<1x64xi1> to vector<16x64xi1>
    %45 = vector.broadcast %cst_13 : f32 to vector<16x64xf32>
    %46 = arith.select %44, %42, %45 : vector<16x64xi1>, vector<16x64xf32>
    %c2_i32_14 = arith.constant 2 : i32
    %47 = tpu.dynamic_rotate %40 by %c2_i32_14 dim 1 : vector<16x64xf32>, i32 -> vector<16x64xf32>
    %cst_15 = arith.constant 0.000000e+00 : f32
    %48 = vector.shape_cast %18 : vector<1x64xi1> to vector<1x64xi1>
    %49 = vector.broadcast %48 : vector<1x64xi1> to vector<16x64xi1>
    %50 = vector.broadcast %cst_15 : f32 to vector<16x64xf32>
    %51 = arith.select %49, %47, %50 : vector<16x64xi1>, vector<16x64xf32>
    %52 = tpu.concatenate %46, %51, %40, %21 in 0 : vector<16x64xf32>, vector<16x64xf32>, vector<16x64xf32>, vector<1x64xf32> -> vector<49x64xf32>
    %cst_16 = arith.constant dense<0.000000e+00> : vector<16x64xf32>
    %53 = tpu.matmul %24, %52, %cst_16 {dimension_numbers = #tpu.dot_dimension_numbers<[1], [0], [0], [1], [0, 0, 1, 1], [], []>} : vector<16x49xf32>, vector<49x64xf32>, vector<16x64xf32> -> vector<16x64xf32>
    %cst_17 = arith.constant 0.000000e+00 : f32
    %54 = vector.broadcast %cst_17 : f32 to vector<16x64xf32>
    %55 = arith.maximumf %53, %54 : vector<16x64xf32>
    %56 = arith.addf %55, %41 : vector<16x64xf32>
    %cst_18 = arith.constant 0.000000e+00 : f32
    %57 = vector.broadcast %cst_18 : f32 to vector<16x64xf32>
    %58 = arith.maximumf %56, %57 : vector<16x64xf32>
    %c0_19 = arith.constant 0 : index
    %c0_20 = arith.constant 0 : index
    %59 = vector.load %arg3[%c0_19, %c0_20] : memref<16x64xf32, #tpu.memory_space<vmem>>, vector<16x64xf32>
    tpu.vector_store %arg3[%c0_19, %c0_20], %58 {strides = array<i32>} : memref<16x64xf32, #tpu.memory_space<vmem>>, vector<16x64xf32>,
    return
  }
  func.func @transform_0(%arg0: i32) -> (i32, i32) {
    %c0_i32 = arith.constant 0 : i32
    %c0_i32_0 = arith.constant 0 : i32
    %c0_i32_1 = arith.constant 0 : i32
    return %c0_i32, %c0_i32_0 : i32, i32
  }
  func.func @transform_1(%arg0: i32) -> (i32, i32) {
    %c0_i32 = arith.constant 0 : i32
    %c0_i32_0 = arith.constant 0 : i32
    %c0_i32_1 = arith.constant 0 : i32
    return %c0_i32, %c0_i32_0 : i32, i32
  }
  func.func @transform_2(%arg0: i32) -> (i32, i32) {
    %c0_i32 = arith.constant 0 : i32
    %c0_i32_0 = arith.constant 0 : i32
    %c0_i32_1 = arith.constant 0 : i32
    return %c0_i32, %c0_i32_0 : i32, i32
  }
}

</mosaic_0001>

<llo_original>
// kernel: temporal_block.1
$region0: #{temporal_block.1}
  #allocation0 [shape = 'u32[]', space=smem, size = 0x4, offset = 0x4, fixed_abs, tag = 'smem constant byte address 0x4 - core index']
  #allocation1 [shape = 'u32[144,128]{1,0:T(1,128)}', space=vmem, size = 0x12000, scoped, tag = 'internal scratch']
  %s0 = inlined_call_operand.vmem [shape: f32[8,64], index: 0, kind: input, shape index: {}]
  %s1 = inlined_call_operand.vmem [shape: f32[48,49], index: 1, kind: input, shape index: {}]
  %s2 = inlined_call_operand.vmem [shape: f32[16,64], index: 2, kind: output, shape index: {}]
  %s3 = sld [smem:[#allocation0]]
  $region18: #{temporal_block.1} parent=0
    _
  %s5 = ssub.s32 1, %s3
  %s6 = scalar_select 0, %s5, %s3
  // Predicated region
  $region2: #{temporal_block.1} parent=0 // pred_check
    _
  $region3: #{temporal_block.1} parent=0 // pred_check_branch
    %8 = sbr.rel (0) target = $region5
  $region4: #{temporal_block.1} parent=0 // pred_region
    _
  $region5: #{temporal_block.1} parent=0 // pred_fallthru
    _
  // Predicated region
  $region6: #{temporal_block.1} parent=0 // pred_check
    _
  $region7: #{temporal_block.1} parent=0 // pred_check_branch
    %10 = sbr.rel (0) target = $region9
  $region8: #{temporal_block.1} parent=0 // pred_region
    _
  $region9: #{temporal_block.1} parent=0 // pred_fallthru
    _
  %v11 = vlaneseq
  %v12 = vand.u32 %v11, 127
  %vm13 = vcmp.lt.s32.totalorder %v12, 0
  %v14 = vsub.s32 0, %v12
  %v15 = vsel %vm13, %v14, %v12
  %v16 = vshrl.u32 %v15, 5
  %v17 = vand.u32 %v15, 31
  %v18 = vsub.s32 0, %v17
  %v19 = vsel %vm13, %v18, %v17
  %vm20 = vcmp.ne.s32.totalorder %v19, 0
  %vm21 = vcmp.lt.s32.totalorder %v19, 0
  %vm22 = vmand %vm21, %vm20
  %v23 = vadd.s32 %v19, 32
  %v24 = vsel %vm22, %v23, %v19
  %vm25 = vcmp.ge.s32.totalorder %v24, 2
  %vm26 = vcmp.ge.s32.totalorder %v24, 4
  %v27 = vld [vmem:[%s1] sm:$0xff]
  %v28 = vld [vmem:[%s1 + $0x8] sm:$0xff]
  %v29 = vld [vmem:[%s1 + $0x10] sm:$0xff]
  %v30 = vld [vmem:[%s1 + $0x18] sm:$0xff]
  %v31 = vld [vmem:[%s1 + $0x20] sm:$0xff]
  %v32 = vld [vmem:[%s1 + $0x28] sm:$0xff]
  %v33 = vld [vmem:[%s0] sm:$0xff]
  %vm34 = vcmask 1048064
  %35 = vrot.lane.b32.xlu0 %v33, 64
  %v36 = vpop.permute.xlu0 %35
  %v37 = vsel %vm34, %v36, %v33
  %38 = vrot.lane.b32.xlu0 %v37, 64
  %v39 = vpop.permute.xlu0 %38
  %v40 = vsel %vm34, %v39, %v33
  %v41 = vsel %vm26, 1, 0
  %vm42 = vcmp.eq.s32.totalorder %v41, 1
  %44 = vrot.lane.b32.xlu0 %v40, 68
  %v45 = vpop.permute.xlu0 %44
  %v47 = vsel %vm42, %v45, 0.0
  %v48 = vsel %vm25, 1, 0
  %vm49 = vcmp.eq.s32.totalorder %v48, 1
  %50 = vrot.lane.b32.xlu0 %v40, 66
  %v51 = vpop.permute.xlu0 %50
  %v53 = vsel %vm49, %v51, 0.0
  %vm54 = vcmask 203776
  %v56 = vsel %vm54, %v27, 0
  %v59 = vsel %vm54, %v28, 0
  %v62 = vsel %vm54, %v29, 0
  %v65 = vsel %vm54, %v30, 0
  %vm67 = vcmask 1040384
  %v69 = vsel %vm67, 1.0, 0
  %71 = vmatprep.subr.mxu0 0.0
  %72 = vmatpush1.msra.mxu0 %v47
  %73 = vmatprep.subr.mxu0 0.0
  %74 = vmatpush1.msra.mxu0 %v53
  %75 = vmatprep.subr.mxu0 0.0
  %76 = vmatpush1.msra.mxu0 %v33
  %77 = vmatprep.subr.mxu0 0.0
  %78 = vmatpush1.msra.mxu0 %v69
  %79 = vmatprep.subr.mxu0 0.0
  %80 = vmatpush1.msra.mxu0 0.0
  %81 = vmatprep.subr.mxu0 0.0
  %82 = vmatpush1.msra.mxu0 0.0
  %83 = vmatprep.subr.mxu0 0.0
  %84 = vmatpush1.msra.mxu0 0.0
  %85 = vmatprep.subr.mxu0 0.0
  %86 = vmatpush1.msra.mxu0 0.0
  %87 = vmatprep.subr.mxu0 0.0
  %88 = vmatpush1.msra.mxu0 0.0
  %89 = vmatprep.subr.mxu0 0.0
  %90 = vmatpush1.msra.mxu0 0.0
  %91 = vmatprep.subr.mxu0 0.0
  %92 = vmatpush1.msra.mxu0 0.0
  %93 = vmatprep.subr.mxu0 0.0
  %94 = vmatpush1.msra.mxu0 0.0
  %95 = vmatprep.subr.mxu0 0.0
  %96 = vmatpush1.msra.mxu0 0.0
  %97 = vmatprep.subr.mxu0 0.0
  %98 = vmatpush1.msra.mxu0 0.0
  %99 = vmatprep.subr.mxu0 0.0
  %100 = vmatpush1.msra.mxu0 0.0
  %101 = vmatprep.subr.mxu0 0.0
  %102 = vmatpush1.msra.mxu0 0.0
  %103 = vmatprep.subr.mxu0 0.0
  %104 = vmatpush1.msra.mxu0 0.0
  %105 = vmatprep.subr.mxu0 0.0
  %106 = vmatpush1.msra.mxu0 0.0
  %107 = vmatprep.subr.mxu0 0.0
  %108 = vmatpush1.msra.mxu0 0.0
  %109 = vmatprep.subr.mxu0 0.0
  %110 = vmatpush1.msra.mxu0 0.0
  %111 = vmatprep.subr.mxu0 0.0
  %112 = vmatpush1.msra.mxu0 0.0
  %113 = vmatprep.subr.mxu0 0.0
  %114 = vmatpush1.msra.mxu0 0.0
  %115 = vmatprep.subr.mxu0 0.0
  %116 = vmatpush1.msra.mxu0 0.0
  %117 = vmatprep.subr.mxu0 0.0
  %118 = vmatpush1.msra.mxu0 0.0
  %119 = vmatprep.subr.mxu0 0.0
  %120 = vmatpush1.msra.mxu0 0.0
  %121 = vmatprep.subr.mxu0 0.0
  %122 = vmatpush1.msra.mxu0 0.0
  %123 = vmatprep.subr.mxu0 0.0
  %124 = vmatpush1.msra.mxu0 0.0
  %125 = vmatprep.subr.mxu0 0.0
  %126 = vmatpush1.msra.mxu0 0.0
  %127 = vmatprep.subr.mxu0 0.0
  %128 = vmatpush1.msra.mxu0 0.0
  %129 = vmatprep.subr.mxu0 0.0
  %130 = vmatpush1.msra.mxu0 0.0
  %131 = vmatprep.subr.mxu0 0.0
  %132 = vmatpush1.msra.mxu0 0.0
  %133 = vmatprep.subr.mxu0 0.0
  %134 = vmatpush1.msra.mxu0 0.0
  %135 = vmatprep.mubr.f32.mxu0 0.0
  %136 = vmatmul.mubr.f32.gmra.mrb[0].mxu0 %v56
  %v137 = vpop.f32.mrb[0].mxu0
  %v138 = vadd.f32 0.0, %v137
  %v139 = vpop.f32.mrb[0].mxu0
  %140 = vmatprep.mubr.f32.mxu0 0.0
  %141 = vmatmul.mubr.f32.gmra.mrb[0].mxu0 %v59
  %v142 = vpop.f32.mrb[0].mxu0
  %v143 = vadd.f32 0.0, %v142
  %v144 = vpop.f32.mrb[0].mxu0
  %145 = vmatprep.mubr.f32.mxu0 0.0
  %146 = vmatmul.mubr.f32.gmra.mrb[0].mxu0 %v62
  %v147 = vpop.f32.mrb[0].mxu0
  %v148 = vadd.f32 0.0, %v147
  %v149 = vpop.f32.mrb[0].mxu0
  %150 = vmatprep.mubr.f32.mxu0 0.0
  %151 = vmatmul.mubr.f32.gmra.mrb[0].mxu0 %v65
  %v152 = vpop.f32.mrb[0].mxu0
  %v153 = vadd.f32 0.0, %v152
  %v154 = vpop.f32.mrb[0].mxu0
  %155 = vdwg.mxu0
  %v156 = vmax.f32 %v138, 0.0
  %v157 = vmax.f32 %v143, 0.0
  %158 = vrot.lane.b32.xlu0 %v156, 64
  %v159 = vpop.permute.xlu0 %158
  %v160 = vsel %vm34, %v159, %v156
  %161 = vrot.lane.b32.xlu0 %v157, 64
  %v162 = vpop.permute.xlu0 %161
  %v163 = vsel %vm34, %v162, %v157
  %164 = vrot.lane.b32.xlu0 %v160, 64
  %v165 = vpop.permute.xlu0 %164
  %166 = vrot.lane.b32.xlu0 %v163, 64
  %v167 = vpop.permute.xlu0 %166
  %v168 = vsel %vm34, %v165, %v156
  %v169 = vsel %vm34, %v167, %v157
  %172 = vrot.lane.b32.xlu0 %v168, 68
  %v173 = vpop.permute.xlu0 %172
  %174 = vrot.lane.b32.xlu0 %v169, 68
  %v175 = vpop.permute.xlu0 %174
  %v178 = vsel %vm42, %v173, 0.0
  %v179 = vsel %vm42, %v175, 0.0
  %180 = vrot.lane.b32.xlu0 %v168, 66
  %v181 = vpop.permute.xlu0 %180
  %182 = vrot.lane.b32.xlu0 %v169, 66
  %v183 = vpop.permute.xlu0 %182
  %v186 = vsel %vm49, %v181, 0.0
  %v187 = vsel %vm49, %v183, 0.0
  %vm188 = vcmask 400384
  %v190 = vsel %vm188, %v31, 0
  %v193 = vsel %vm188, %v32, 0
  %195 = vmatprep.subr.mxu0 0.0
  %196 = vmatpush1.msra.mxu0 %v178
  %197 = vmatprep.subr.mxu0 0.0
  %198 = vmatpush1.msra.mxu0 %v179
  %199 = vmatprep.subr.mxu0 0.0
  %200 = vmatpush1.msra.mxu0 %v186
  %201 = vmatprep.subr.mxu0 0.0
  %202 = vmatpush1.msra.mxu0 %v187
  %203 = vmatprep.subr.mxu0 0.0
  %204 = vmatpush1.msra.mxu0 %v156
  %205 = vmatprep.subr.mxu0 0.0
  %206 = vmatpush1.msra.mxu0 %v157
  %207 = vmatprep.subr.mxu0 0.0
  %208 = vmatpush1.msra.mxu0 %v69
  %209 = vmatprep.subr.mxu0 0.0
  %210 = vmatpush1.msra.mxu0 0.0
  %211 = vmatprep.subr.mxu0 0.0
  %212 = vmatpush1.msra.mxu0 0.0
  %213 = vmatprep.subr.mxu0 0.0
  %214 = vmatpush1.msra.mxu0 0.0
  %215 = vmatprep.subr.mxu0 0.0
  %216 = vmatpush1.msra.mxu0 0.0
  %217 = vmatprep.subr.mxu0 0.0
  %218 = vmatpush1.msra.mxu0 0.0
  %219 = vmatprep.subr.mxu0 0.0
  %220 = vmatpush1.msra.mxu0 0.0
  %221 = vmatprep.subr.mxu0 0.0
  %222 = vmatpush1.msra.mxu0 0.0
  %223 = vmatprep.subr.mxu0 0.0
  %224 = vmatpush1.msra.mxu0 0.0
  %225 = vmatprep.subr.mxu0 0.0
  %226 = vmatpush1.msra.mxu0 0.0
  %227 = vmatprep.subr.mxu0 0.0
  %228 = vmatpush1.msra.mxu0 0.0
  %229 = vmatprep.subr.mxu0 0.0
  %230 = vmatpush1.msra.mxu0 0.0
  %231 = vmatprep.subr.mxu0 0.0
  %232 = vmatpush1.msra.mxu0 0.0
  %233 = vmatprep.subr.mxu0 0.0
  %234 = vmatpush1.msra.mxu0 0.0
  %235 = vmatprep.subr.mxu0 0.0
  %236 = vmatpush1.msra.mxu0 0.0
  %237 = vmatprep.subr.mxu0 0.0
  %238 = vmatpush1.msra.mxu0 0.0
  %239 = vmatprep.subr.mxu0 0.0
  %240 = vmatpush1.msra.mxu0 0.0
  %241 = vmatprep.subr.mxu0 0.0
  %242 = vmatpush1.msra.mxu0 0.0
  %243 = vmatprep.subr.mxu0 0.0
  %244 = vmatpush1.msra.mxu0 0.0
  %245 = vmatprep.subr.mxu0 0.0
  %246 = vmatpush1.msra.mxu0 0.0
  %247 = vmatprep.subr.mxu0 0.0
  %248 = vmatpush1.msra.mxu0 0.0
  %249 = vmatprep.subr.mxu0 0.0
  %250 = vmatpush1.msra.mxu0 0.0
  %251 = vmatprep.subr.mxu0 0.0
  %252 = vmatpush1.msra.mxu0 0.0
  %253 = vmatprep.subr.mxu0 0.0
  %254 = vmatpush1.msra.mxu0 0.0
  %255 = vmatprep.subr.mxu0 0.0
  %256 = vmatpush1.msra.mxu0 0.0
  %257 = vmatprep.subr.mxu0 0.0
  %258 = vmatpush1.msra.mxu0 0.0
  %259 = vmatprep.mubr.f32.mxu0 0.0
  %260 = vmatmul.mubr.f32.gmra.mrb[0].mxu0 %v190
  %v261 = vpop.f32.mrb[0].mxu0
  %v262 = vadd.f32 0.0, %v261
  %v263 = vpop.f32.mrb[0].mxu0
  %264 = vmatprep.mubr.f32.mxu0 0.0
  %265 = vmatmul.mubr.f32.gmra.mrb[0].mxu0 %v193
  %v266 = vpop.f32.mrb[0].mxu0
  %v267 = vadd.f32 0.0, %v266
  %v268 = vpop.f32.mrb[0].mxu0
  %269 = vdwg.mxu0
  %v270 = vmax.f32 %v262, 0.0
  %v271 = vmax.f32 %v267, 0.0
  %v272 = vadd.f32 %v270, %v148
  %v273 = vadd.f32 %v271, %v153
  %v274 = vmax.f32 %v272, 0.0
  %v275 = vmax.f32 %v273, 0.0
  %vm276 = vcmask 523264
  %277 = vst.msk [vmem:[%s2] sm:$0xff] %vm276, %v274
  %278 = vst.msk [vmem:[%s2 + $0x8] sm:$0xff] %vm276, %v275
  // Predicated region
  $region10: #{temporal_block.1} parent=0 // pred_check
    _
  $region11: #{temporal_block.1} parent=0 // pred_check_branch
    %280 = sbr.rel (0) target = $region13
  $region12: #{temporal_block.1} parent=0 // pred_region
    _
  $region13: #{temporal_block.1} parent=0 // pred_fallthru
    _
  // Predicated region
  $region14: #{temporal_block.1} parent=0 // pred_check
    _
  $region15: #{temporal_block.1} parent=0 // pred_check_branch
    %282 = sbr.rel (0) target = $region17
  $region16: #{temporal_block.1} parent=0 // pred_region
    _
  $region17: #{temporal_block.1} parent=0 // pred_fallthru
    _

</llo_original>
